<compile_context>
chip_gen: v7x
topology: tpu7x:2x2x1
jax: 0.10.0
libtpu: 0.0.40
codegen_flags: <defaults>
</compile_context>

<pallas_src>
import jax
import jax.numpy as jnp
from jax.experimental import pallas as pl
from jax.experimental.pallas import tpu as pltpu


# ---------------------------------------------------------------------------
# Fused Pallas kernel: encoder (pool + projection) + contrastive loss
# ---------------------------------------------------------------------------
def _contrastive_frame_kernel(scalars_ref, vf_ref, vm_ref, w_ref, b_ref,
                              emb_ref, loss_ref):
    # scalars_ref: SMEM f32[2] = [1/temp, alpha]
    # vf_ref:      VMEM f32[B, T, Dv]  video features
    # vm_ref:      VMEM f32[B, T, 1]   video mask (0/1)
    # w_ref:       VMEM f32[Dv, D]     projection weight
    # b_ref:       VMEM f32[1, D]      projection bias
    # emb_ref:     VMEM f32[B, D]      output embedding (module returns emb1)
    # loss_ref:    SMEM f32[1]         scalar contrastive loss
    inv_temp = scalars_ref[0]
    alpha = scalars_ref[1]

    vf = vf_ref[...].astype(jnp.float32)                 # (B, T, Dv)
    vm = vm_ref[...].astype(jnp.float32)                 # (B, T, 1)

    # --- synthetic encoder: masked mean-pool over frames + linear projection
    denom = jnp.maximum(jnp.sum(vm, axis=1), 1.0)        # (B, 1)
    pooled = jnp.sum(vf * vm, axis=1) / denom            # (B, Dv)
    emb = jnp.dot(pooled, w_ref[...],
                  preferred_element_type=jnp.float32) + b_ref[...]   # (B, D)
    emb_ref[...] = emb

    # --- normalize: torch F.normalize semantics x / max(||x||, 1e-12),
    #     done as rsqrt(max(sumsq, eps^2)) * x; fold 1/temp into one operand.
    eps2 = jnp.float32(1e-24)                            # (1e-12)^2
    inv_norm = jax.lax.rsqrt(
        jnp.maximum(jnp.sum(emb * emb, axis=-1, keepdims=True), eps2))  # (B,1)
    # deterministic stand-in encoder => emb2 == emb1, reuse emb / inv_norm
    n1 = emb * (inv_norm * inv_temp)                     # carries the 1/temp
    n2 = emb * inv_norm

    # sim = (n1 @ n2.T) without materializing the transpose (contract 1 vs 1)
    sim = jax.lax.dot_general(
        n1, n2, dimension_numbers=(((1,), (1,)), ((), ())),
        preferred_element_type=jnp.float32)              # (B, B)

    # log-softmax along dim 1; diagonal term computed directly as n1_i . n2_i
    m = jnp.max(sim, axis=1, keepdims=True)              # (B, 1)
    lse = jnp.log(jnp.sum(jnp.exp(sim - m), axis=1, keepdims=True)) + m
    diag_sim = jnp.sum(n1 * n2, axis=-1, keepdims=True)  # (B, 1) == diag(sim)
    per_row = diag_sim - lse                             # diag(log_softmax)
    loss_ref[0] = -jnp.mean(per_row) * alpha


def contrastive_frame_forward(params, temp, alpha, video_feature, video_mask,
                              text_input_ids, text_mask, target):
    # TODO(synk): the real encoder is an external nn.Module where emb1/emb2
    # differ only via dropout; the deterministic stand-in makes emb1 == emb2,
    # so the encoder body (pool + projection) is computed once inside the
    # kernel instead of twice.
    del text_input_ids, text_mask, target   # unused by the synthetic encoder
    B, T, Dv = video_feature.shape
    D = params["W"].shape[1]

    scalars = jnp.array([1.0 / temp, alpha], dtype=jnp.float32)
    vm3 = video_mask.reshape(B, T, 1).astype(jnp.float32)
    w = params["W"].astype(jnp.float32)
    b2d = params["b"].reshape(1, D).astype(jnp.float32)

    emb, loss = pl.pallas_call(
        _contrastive_frame_kernel,
        out_shape=(
            jax.ShapeDtypeStruct((B, D), jnp.float32),   # emb1
            jax.ShapeDtypeStruct((1,), jnp.float32),     # loss
        ),
        in_specs=[
            pl.BlockSpec(memory_space=pltpu.MemorySpace.SMEM),   # [1/temp, alpha]
            pl.BlockSpec(memory_space=pltpu.MemorySpace.VMEM),   # video_feature
            pl.BlockSpec(memory_space=pltpu.MemorySpace.VMEM),   # video_mask
            pl.BlockSpec(memory_space=pltpu.MemorySpace.VMEM),   # W
            pl.BlockSpec(memory_space=pltpu.MemorySpace.VMEM),   # b
        ],
        out_specs=(
            pl.BlockSpec(memory_space=pltpu.MemorySpace.VMEM),   # emb (lane-dense)
            pl.BlockSpec(memory_space=pltpu.MemorySpace.SMEM),   # loss scalar
        ),
    )(scalars, video_feature, vm3, w, b2d)
    return emb, None, None, loss[0]


# ---------------------------------------------------------------------------
# Pure-JAX reference (encoder + torch-semantics contrastive loss)
# ---------------------------------------------------------------------------
def _reference(params, temp, alpha, video_feature, video_mask):
    mask = video_mask[..., None]
    pooled = jnp.sum(video_feature * mask, axis=1) / jnp.maximum(
        jnp.sum(mask, axis=1), 1.0)
    emb = jnp.dot(pooled, params["W"],
                  precision=jax.lax.Precision.HIGHEST) + params["b"]
    eps = 1e-12
    n = emb / jnp.maximum(jnp.linalg.norm(emb, axis=-1, keepdims=True), eps)
    sim = jnp.dot(n, n.T, precision=jax.lax.Precision.HIGHEST) / temp
    logp = jax.nn.log_softmax(sim, axis=1)
    tgt = jnp.eye(sim.shape[0], dtype=jnp.float32)
    loss = -jnp.mean(jnp.sum(logp * tgt, axis=1)) * alpha
    return emb, loss


if __name__ == "__main__":
    key = jax.random.PRNGKey(0)
    B, T, Dv, D, L = 8, 12, 32, 128, 16   # batch, frames, video dim, hidden, seq

    k_vf, k_w, k_b, k_ids = jax.random.split(key, 4)
    video_feature = jax.random.normal(k_vf, (B, T, Dv), dtype=jnp.float32)
    # partially-masked frames to exercise the masked mean-pool
    lens = jnp.array([T, T - 2, T, T - 4, T, T, T - 1, T], dtype=jnp.int32)
    video_mask = (jnp.arange(T)[None, :] < lens[:, None]).astype(jnp.float32)
    text_input_ids = jax.random.randint(k_ids, (B, L), 0, 100, dtype=jnp.int32)
    text_mask = jnp.ones((B, L), dtype=jnp.float32)
    target = jnp.arange(B, dtype=jnp.int32)

    params = {
        "W": jax.random.normal(k_w, (Dv, D), dtype=jnp.float32) * 0.05,
        "b": jax.random.normal(k_b, (D,), dtype=jnp.float32) * 0.01,
    }
    temp, alpha = 0.07, 0.5   # args.temp, args.alpha

    emb1, _, _, loss = contrastive_frame_forward(
        params, temp, alpha, video_feature, video_mask,
        text_input_ids, text_mask, target)
    loss = jax.block_until_ready(loss)
    emb1 = jax.block_until_ready(emb1)

    emb_ref, loss_ref = _reference(params, temp, alpha, video_feature, video_mask)
    assert jnp.allclose(emb1, emb_ref, rtol=1e-4, atol=1e-4), \
        (jnp.max(jnp.abs(emb1 - emb_ref)))
    assert jnp.allclose(loss, loss_ref, rtol=1e-4, atol=1e-4), (loss, loss_ref)

    print("KERNEL_OK")
</pallas_src>

<mosaic_0001>
module attributes {stable_mosaic.version = 11 : i64} {
  func.func @_contrastive_frame_kernel(%arg0: memref<2xf32, #tpu.memory_space<smem>>, %arg1: memref<8x12x32xf32, #tpu.memory_space<vmem>>, %arg2: memref<8x12x1xf32, #tpu.memory_space<vmem>>, %arg3: memref<32x128xf32, #tpu.memory_space<vmem>>, %arg4: memref<1x128xf32, #tpu.memory_space<vmem>>, %arg5: memref<8x128xf32, #tpu.memory_space<vmem>>, %arg6: memref<1xf32, #tpu.memory_space<smem>>) attributes {dimension_semantics = [], scalar_prefetch = 0 : i64, scratch_operands = 0 : i64, tpu.core_type = #tpu.core_type<tc>} {
    %c0 = arith.constant 0 : index
    %0 = memref.load %arg0[%c0] : memref<2xf32, #tpu.memory_space<smem>>
    %c1 = arith.constant 1 : index
    %1 = memref.load %arg0[%c1] : memref<2xf32, #tpu.memory_space<smem>>
    %c0_0 = arith.constant 0 : index
    %c0_1 = arith.constant 0 : index
    %c0_2 = arith.constant 0 : index
    %2 = vector.load %arg1[%c0_0, %c0_1, %c0_2] : memref<8x12x32xf32, #tpu.memory_space<vmem>>, vector<8x12x32xf32>
    %c0_3 = arith.constant 0 : index
    %c0_4 = arith.constant 0 : index
    %c0_5 = arith.constant 0 : index
    %3 = vector.load %arg2[%c0_3, %c0_4, %c0_5] : memref<8x12x1xf32, #tpu.memory_space<vmem>>, vector<8x12x1xf32>
    %cst = arith.constant dense<0.000000e+00> : vector<8x1xf32>
    %4 = vector.multi_reduction <add>, %3, %cst [1] : vector<8x12x1xf32> to vector<8x1xf32>
    %cst_6 = arith.constant 1.000000e+00 : f32
    %5 = vector.broadcast %cst_6 : f32 to vector<8x1xf32>
    %6 = arith.maximumf %4, %5 : vector<8x1xf32>
    %7 = vector.broadcast %3 : vector<8x12x1xf32> to vector<8x12x32xf32>
    %8 = arith.mulf %2, %7 : vector<8x12x32xf32>
    %cst_7 = arith.constant dense<0.000000e+00> : vector<8x32xf32>
    %9 = vector.multi_reduction <add>, %8, %cst_7 [1] : vector<8x12x32xf32> to vector<8x32xf32>
    %10 = vector.broadcast %6 : vector<8x1xf32> to vector<8x32xf32>
    %11 = arith.divf %9, %10 : vector<8x32xf32>
    %c0_8 = arith.constant 0 : index
    %c0_9 = arith.constant 0 : index
    %12 = vector.load %arg3[%c0_8, %c0_9] : memref<32x128xf32, #tpu.memory_space<vmem>>, vector<32x128xf32>
    %cst_10 = arith.constant dense<0.000000e+00> : vector<8x128xf32>
    %13 = tpu.matmul %11, %12, %cst_10 {dimension_numbers = #tpu.dot_dimension_numbers<[1], [0], [0], [1], [0, 0, 1, 1], [], []>} : vector<8x32xf32>, vector<32x128xf32>, vector<8x128xf32> -> vector<8x128xf32>
    %c0_11 = arith.constant 0 : index
    %c0_12 = arith.constant 0 : index
    %14 = vector.load %arg4[%c0_11, %c0_12] : memref<1x128xf32, #tpu.memory_space<vmem>>, vector<1x128xf32>
    %15 = vector.broadcast %14 : vector<1x128xf32> to vector<8x128xf32>
    %16 = arith.addf %13, %15 : vector<8x128xf32>
    %c0_13 = arith.constant 0 : index
    %c0_14 = arith.constant 0 : index
    %17 = vector.load %arg5[%c0_13, %c0_14] : memref<8x128xf32, #tpu.memory_space<vmem>>, vector<8x128xf32>
    tpu.vector_store %arg5[%c0_13, %c0_14], %16 {strides = array<i32>} : memref<8x128xf32, #tpu.memory_space<vmem>>, vector<8x128xf32>,
    %18 = arith.mulf %16, %16 : vector<8x128xf32>
    %cst_15 = arith.constant dense<0.000000e+00> : vector<8xf32>
    %19 = vector.multi_reduction <add>, %18, %cst_15 [1] : vector<8x128xf32> to vector<8xf32>
    %20 = vector.shape_cast %19 : vector<8xf32> to vector<8x1xf32>
    %cst_16 = arith.constant 1.000000e-24 : f32
    %21 = vector.broadcast %cst_16 : f32 to vector<8x1xf32>
    %22 = arith.maximumf %20, %21 : vector<8x1xf32>
    %23 = math.rsqrt %22 : vector<8x1xf32>
    %24 = vector.broadcast %0 : f32 to vector<8x1xf32>
    %25 = arith.mulf %23, %24 : vector<8x1xf32>
    %26 = vector.broadcast %25 : vector<8x1xf32> to vector<8x128xf32>
    %27 = arith.mulf %16, %26 : vector<8x128xf32>
    %28 = vector.broadcast %23 : vector<8x1xf32> to vector<8x128xf32>
    %29 = arith.mulf %16, %28 : vector<8x128xf32>
    %cst_17 = arith.constant dense<0.000000e+00> : vector<8x8xf32>
    %30 = tpu.matmul %27, %29, %cst_17 {dimension_numbers = #tpu.dot_dimension_numbers<[1], [1], [0], [0], [0, 0, 1, 0], [], []>} : vector<8x128xf32>, vector<8x128xf32>, vector<8x8xf32> -> vector<8x8xf32>
    %cst_18 = arith.constant dense<0xFF800000> : vector<8xf32>
    %31 = vector.multi_reduction <maximumf>, %30, %cst_18 [1] : vector<8x8xf32> to vector<8xf32>
    %32 = vector.shape_cast %31 : vector<8xf32> to vector<8x1xf32>
    %33 = vector.broadcast %32 : vector<8x1xf32> to vector<8x8xf32>
    %34 = arith.subf %30, %33 : vector<8x8xf32>
    %35 = math.exp %34 : vector<8x8xf32>
    %cst_19 = arith.constant dense<0.000000e+00> : vector<8xf32>
    %36 = vector.multi_reduction <add>, %35, %cst_19 [1] : vector<8x8xf32> to vector<8xf32>
    %37 = vector.shape_cast %36 : vector<8xf32> to vector<8x1xf32>
    %38 = math.log %37 : vector<8x1xf32>
    %39 = arith.addf %38, %32 : vector<8x1xf32>
    %40 = arith.mulf %27, %29 : vector<8x128xf32>
    %cst_20 = arith.constant dense<0.000000e+00> : vector<8xf32>
    %41 = vector.multi_reduction <add>, %40, %cst_20 [1] : vector<8x128xf32> to vector<8xf32>
    %42 = vector.shape_cast %41 : vector<8xf32> to vector<8x1xf32>
    %43 = arith.subf %42, %39 : vector<8x1xf32>
    %44 = vector.shape_cast %43 : vector<8x1xf32> to vector<1x8x1xf32>
    %cst_21 = arith.constant dense<0.000000e+00> : vector<1xf32>
    %45 = vector.multi_reduction <add>, %44, %cst_21 [1, 2] : vector<1x8x1xf32> to vector<1xf32>
    %46 = vector.shape_cast %45 : vector<1xf32> to vector<1x1x1xf32>
    %47 = vector.extract %46[0, 0, 0] : f32 from vector<1x1x1xf32>
    %cst_22 = arith.constant 8.000000e+00 : f32
    %48 = arith.divf %47, %cst_22 : f32
    %cst_23 = arith.constant 0.000000e+00 : f32
    %49 = arith.subf %cst_23, %48 : f32
    %50 = arith.mulf %49, %1 : f32
    %c0_24 = arith.constant 0 : index
    %51 = memref.load %arg6[%c0_24] : memref<1xf32, #tpu.memory_space<smem>>
    memref.store %50, %arg6[%c0_24] : memref<1xf32, #tpu.memory_space<smem>>
    return
  }
}

</mosaic_0001>

<llo_original>
// kernel: tpu_custom_call.1
$region0: #{tpu_custom_call.1}
  #allocation0 [shape = 'u32[]', space=smem, size = 0x4, offset = 0x4, fixed_abs, tag = 'smem constant byte address 0x4 - core index']
  #allocation1 [shape = 'u32[144,128]{1,0:T(1,128)}', space=vmem, size = 0x12000, scoped, tag = 'internal scratch']
  %s0 = inlined_call_operand.vmem [shape: f32[2], index: 0, kind: input, shape index: {}]
  %s1 = inlined_call_operand.vmem [shape: f32[8,12,32], index: 1, kind: input, shape index: {}]
  %s2 = inlined_call_operand.vmem [shape: f32[8,12,1], index: 2, kind: input, shape index: {}]
  %s3 = inlined_call_operand.vmem [shape: f32[32,128], index: 3, kind: input, shape index: {}]
  %s4 = inlined_call_operand.vmem [shape: f32[1,128], index: 4, kind: input, shape index: {}]
  %s5 = inlined_call_operand.hbm [shape: f32[8,128], index: 5, kind: output, shape index: {0}]
  %s6 = inlined_call_operand.hbm [shape: f32[1], index: 6, kind: output, shape index: {1}]
  %7 = xla_tuple %s5, %s6
  %s8 = sld [smem:[#allocation0]]
  $region42: #{tpu_custom_call.1} parent=0
    _
  %s10 = ssub.s32 1, %s8
  %s11 = scalar_select 0, %s10, %s8
  $region1: #{tpu_custom_call.1} parent=0
    #allocation2 [shape = 'u8[512]{0}', space=smem, size = 0x200, scoped, tag = 'input window, operand 0, single buffered']
    #allocation3 [shape = 's32[1]{0}', space=sflag, size = 0x4, scoped, tag = 'scoped memory for tpu_custom_call.1']
    #allocation4 [shape = 's32[1]{0}', space=sflag, size = 0x4, scoped, tag = 'scoped memory for tpu_custom_call.1']
    #allocation5 [shape = 's32[1]{0}', space=sflag, size = 0x4, scoped, tag = 'scoped memory for tpu_custom_call.1']
    #allocation6 [shape = 'u8[4096]{0}', space=vmem, size = 0x1000, scoped, tag = 'output window, operand 0, single buffered']
    #allocation7 [shape = 'u8[512]{0}', space=smem, size = 0x200, scoped, tag = 'output window, operand 1, single buffered']
    %12 = vsyncpa [#allocation5], 0
    %13 = vsyncpa [#allocation3], 0
    %14 = vsyncpa [#allocation4], 0
    // Predicated region
    $region2: #{tpu_custom_call.1} parent=1 // pred_check
      _
    $region3: #{tpu_custom_call.1} parent=1 // pred_check_branch
      %16 = sbr.rel (0) target = $region5
    $region4: #{tpu_custom_call.1} parent=1 // pred_region
      %s18 = ssub.s32 16, 16
      %19 = vsyncadd [#allocation5], %s18
      %s21 = sshll.u32 %s0, 4
      %s22 = int_to_ptr.vmem [resolvable:$true] %s21
      %24 = dma.vmem_to_smem %s22, 16, [#allocation2], [#allocation5]
    $region5: #{tpu_custom_call.1} parent=1 // pred_fallthru
      _
    // Predicated region
    $region6: #{tpu_custom_call.1} parent=1 // pred_check
      _
    $region7: #{tpu_custom_call.1} parent=1 // pred_check_branch
      %26 = sbr.rel (0) target = $region9
    $region8: #{tpu_custom_call.1} parent=1 // pred_region
      _
    $region9: #{tpu_custom_call.1} parent=1 // pred_fallthru
      _
    // Predicated region
    $region10: #{tpu_custom_call.1} parent=1 // pred_check
      _
    $region11: #{tpu_custom_call.1} parent=1 // pred_check_branch
      %28 = sbr.rel (0) target = $region13
    $region12: #{tpu_custom_call.1} parent=1 // pred_region
      _
    $region13: #{tpu_custom_call.1} parent=1 // pred_fallthru
      _
    // Predicated region
    $region14: #{tpu_custom_call.1} parent=1 // pred_check
      _
    $region15: #{tpu_custom_call.1} parent=1 // pred_check_branch
      %30 = sbr.rel (0) target = $region17
    $region16: #{tpu_custom_call.1} parent=1 // pred_region
      _
    $region17: #{tpu_custom_call.1} parent=1 // pred_fallthru
      _
    // Predicated region
    $region18: #{tpu_custom_call.1} parent=1 // pred_check
      _
    $region19: #{tpu_custom_call.1} parent=1 // pred_check_branch
      %32 = sbr.rel (0) target = $region21
    $region20: #{tpu_custom_call.1} parent=1 // pred_region
      _
    $region21: #{tpu_custom_call.1} parent=1 // pred_fallthru
      _
    // Predicated region
    $region22: #{tpu_custom_call.1} parent=1 // pred_check
      _
    $region23: #{tpu_custom_call.1} parent=1 // pred_check_branch
      %34 = sbr.rel (0) target = $region25
    $region24: #{tpu_custom_call.1} parent=1 // pred_region
      %35 = dma.done [#allocation5], 16
    $region25: #{tpu_custom_call.1} parent=1 // pred_fallthru
      _
    %36 = sfence
    %s37 = sld [smem:[#allocation2]]
    %s38 = sld [smem:[#allocation2 + $0x1]]
    %v39 = vld [vmem:[%s1] sm:$0xff]
    %v40 = vld [vmem:[%s1 + $0x8] sm:$0xf]
    %v41 = vld [vmem:[%s1 + $0x10] sm:$0xff]
    %v42 = vld [vmem:[%s1 + $0x18] sm:$0xf]
    %v43 = vld [vmem:[%s1 + $0x20] sm:$0xff]
    %v44 = vld [vmem:[%s1 + $0x28] sm:$0xf]
    %v45 = vld [vmem:[%s1 + $0x30] sm:$0xff]
    %v46 = vld [vmem:[%s1 + $0x38] sm:$0xf]
    %v47 = vld [vmem:[%s1 + $0x40] sm:$0xff]
    %v48 = vld [vmem:[%s1 + $0x48] sm:$0xf]
    %v49 = vld [vmem:[%s1 + $0x50] sm:$0xff]
    %v50 = vld [vmem:[%s1 + $0x58] sm:$0xf]
    %v51 = vld [vmem:[%s1 + $0x60] sm:$0xff]
    %v52 = vld [vmem:[%s1 + $0x68] sm:$0xf]
    %v53 = vld [vmem:[%s1 + $0x70] sm:$0xff]
    %v54 = vld [vmem:[%s1 + $0x78] sm:$0xf]
    %v55 = vld [vmem:[%s2] sm:$0xff]
    %v56 = vld [vmem:[%s2 + $0x8] sm:$0xf]
    %v57 = vld [vmem:[%s2 + $0x10] sm:$0xff]
    %v58 = vld [vmem:[%s2 + $0x18] sm:$0xf]
    %v59 = vld [vmem:[%s2 + $0x20] sm:$0xff]
    %v60 = vld [vmem:[%s2 + $0x28] sm:$0xf]
    %v61 = vld [vmem:[%s2 + $0x30] sm:$0xff]
    %v62 = vld [vmem:[%s2 + $0x38] sm:$0xf]
    %v63 = vld [vmem:[%s2 + $0x40] sm:$0xff]
    %v64 = vld [vmem:[%s2 + $0x48] sm:$0xf]
    %v65 = vld [vmem:[%s2 + $0x50] sm:$0xff]
    %v66 = vld [vmem:[%s2 + $0x58] sm:$0xf]
    %v67 = vld [vmem:[%s2 + $0x60] sm:$0xff]
    %v68 = vld [vmem:[%s2 + $0x68] sm:$0xf]
    %v69 = vld [vmem:[%s2 + $0x70] sm:$0xff]
    %v70 = vld [vmem:[%s2 + $0x78] sm:$0xf]
    %vm71 = vcmask 7168
    %v72 = vsel %vm71, %v55, 0.0
    %vm73 = vcmask 3072
    %v74 = vsel %vm73, %v56, 0.0
    %v75 = vadd.f32 %v72, %v74
    %v76 = vrot.slane %v75, 4
    %v77 = vadd.f32 %v75, %v76
    %v78 = vrot.slane %v77, 2
    %v79 = vadd.f32 %v77, %v78
    %v80 = vrot.slane %v79, 1
    %v81 = vadd.f32 %v79, %v80
    %v82 = vsel %vm71, %v57, 0.0
    %v83 = vsel %vm73, %v58, 0.0
    %v84 = vadd.f32 %v82, %v83
    %v85 = vrot.slane %v84, 4
    %v86 = vadd.f32 %v84, %v85
    %v87 = vrot.slane %v86, 2
    %v88 = vadd.f32 %v86, %v87
    %v89 = vrot.slane %v88, 1
    %v90 = vadd.f32 %v88, %v89
    %v91 = vsel %vm71, %v59, 0.0
    %v92 = vsel %vm73, %v60, 0.0
    %v93 = vadd.f32 %v91, %v92
    %v94 = vrot.slane %v93, 4
    %v95 = vadd.f32 %v93, %v94
    %v96 = vrot.slane %v95, 2
    %v97 = vadd.f32 %v95, %v96
    %v98 = vrot.slane %v97, 1
    %v99 = vadd.f32 %v97, %v98
    %v100 = vsel %vm71, %v61, 0.0
    %v101 = vsel %vm73, %v62, 0.0
    %v102 = vadd.f32 %v100, %v101
    %v103 = vrot.slane %v102, 4
    %v104 = vadd.f32 %v102, %v103
    %v105 = vrot.slane %v104, 2
    %v106 = vadd.f32 %v104, %v105
    %v107 = vrot.slane %v106, 1
    %v108 = vadd.f32 %v106, %v107
    %v109 = vsel %vm71, %v63, 0.0
    %v110 = vsel %vm73, %v64, 0.0
    %v111 = vadd.f32 %v109, %v110
    %v112 = vrot.slane %v111, 4
    %v113 = vadd.f32 %v111, %v112
    %v114 = vrot.slane %v113, 2
    %v115 = vadd.f32 %v113, %v114
    %v116 = vrot.slane %v115, 1
    %v117 = vadd.f32 %v115, %v116
    %v118 = vsel %vm71, %v65, 0.0
    %v119 = vsel %vm73, %v66, 0.0
    %v120 = vadd.f32 %v118, %v119
    %v121 = vrot.slane %v120, 4
    %v122 = vadd.f32 %v120, %v121
    %v123 = vrot.slane %v122, 2
    %v124 = vadd.f32 %v122, %v123
    %v125 = vrot.slane %v124, 1
    %v126 = vadd.f32 %v124, %v125
    %v127 = vsel %vm71, %v67, 0.0
    %v128 = vsel %vm73, %v68, 0.0
    %v129 = vadd.f32 %v127, %v128
    %v130 = vrot.slane %v129, 4
    %v131 = vadd.f32 %v129, %v130
    %v132 = vrot.slane %v131, 2
    %v133 = vadd.f32 %v131, %v132
    %v134 = vrot.slane %v133, 1
    %v135 = vadd.f32 %v133, %v134
    %v136 = vsel %vm71, %v69, 0.0
    %v137 = vsel %vm73, %v70, 0.0
    %v138 = vadd.f32 %v136, %v137
    %v139 = vrot.slane %v138, 4
    %v140 = vadd.f32 %v138, %v139
    %v141 = vrot.slane %v140, 2
    %v142 = vadd.f32 %v140, %v141
    %v143 = vrot.slane %v142, 1
    %v144 = vadd.f32 %v142, %v143
    %v145 = vmax.f32 %v81, 1.0
    %v146 = vmax.f32 %v90, 1.0
    %v147 = vmax.f32 %v99, 1.0
    %v148 = vmax.f32 %v108, 1.0
    %v149 = vmax.f32 %v117, 1.0
    %v150 = vmax.f32 %v126, 1.0
    %v151 = vmax.f32 %v135, 1.0
    %v152 = vmax.f32 %v144, 1.0
    %154 = vset.pattern.permute.xlu0 0
    %155 = vperm.xlu0 %154, %v55
    %v156 = vpop.permute.xlu0 %155
    %159 = vset.pattern.permute.xlu0 0
    %160 = vperm.xlu0 %159, %v56
    %v161 = vpop.permute.xlu0 %160
    %164 = vset.pattern.permute.xlu0 0
    %165 = vperm.xlu0 %164, %v57
    %v166 = vpop.permute.xlu0 %165
    %169 = vset.pattern.permute.xlu0 0
    %170 = vperm.xlu0 %169, %v58
    %v171 = vpop.permute.xlu0 %170
    %174 = vset.pattern.permute.xlu0 0
    %175 = vperm.xlu0 %174, %v59
    %v176 = vpop.permute.xlu0 %175
    %179 = vset.pattern.permute.xlu0 0
    %180 = vperm.xlu0 %179, %v60
    %v181 = vpop.permute.xlu0 %180
    %184 = vset.pattern.permute.xlu0 0
    %185 = vperm.xlu0 %184, %v61
    %v186 = vpop.permute.xlu0 %185
    %189 = vset.pattern.permute.xlu0 0
    %190 = vperm.xlu0 %189, %v62
    %v191 = vpop.permute.xlu0 %190
    %194 = vset.pattern.permute.xlu0 0
    %195 = vperm.xlu0 %194, %v63
    %v196 = vpop.permute.xlu0 %195
    %199 = vset.pattern.permute.xlu0 0
    %200 = vperm.xlu0 %199, %v64
    %v201 = vpop.permute.xlu0 %200
    %204 = vset.pattern.permute.xlu0 0
    %205 = vperm.xlu0 %204, %v65
    %v206 = vpop.permute.xlu0 %205
    %209 = vset.pattern.permute.xlu0 0
    %210 = vperm.xlu0 %209, %v66
    %v211 = vpop.permute.xlu0 %210
    %214 = vset.pattern.permute.xlu0 0
    %215 = vperm.xlu0 %214, %v67
    %v216 = vpop.permute.xlu0 %215
    %219 = vset.pattern.permute.xlu0 0
    %220 = vperm.xlu0 %219, %v68
    %v221 = vpop.permute.xlu0 %220
    %224 = vset.pattern.permute.xlu0 0
    %225 = vperm.xlu0 %224, %v69
    %v226 = vpop.permute.xlu0 %225
    %229 = vset.pattern.permute.xlu0 0
    %230 = vperm.xlu0 %229, %v70
    %v231 = vpop.permute.xlu0 %230
    %v233 = vmul.f32 %v39, %v156
    %v234 = vmul.f32 %v40, %v161
    %v235 = vmul.f32 %v41, %v166
    %v236 = vmul.f32 %v42, %v171
    %v237 = vmul.f32 %v43, %v176
    %v238 = vmul.f32 %v44, %v181
    %v239 = vmul.f32 %v45, %v186
    %v240 = vmul.f32 %v46, %v191
    %v241 = vmul.f32 %v47, %v196
    %v242 = vmul.f32 %v48, %v201
    %v243 = vmul.f32 %v49, %v206
    %v244 = vmul.f32 %v50, %v211
    %v245 = vmul.f32 %v51, %v216
    %v246 = vmul.f32 %v52, %v221
    %v247 = vmul.f32 %v53, %v226
    %v248 = vmul.f32 %v54, %v231
    %vm249 = vcmask 261120
    %v250 = vsel %vm249, %v233, 0.0
    %vm251 = vcmask 257024
    %v252 = vsel %vm251, %v234, 0.0
    %v253 = vadd.f32 %v250, %v252
    %v254 = vrot.slane %v253, 4
    %v255 = vadd.f32 %v253, %v254
    %v256 = vrot.slane %v255, 2
    %v257 = vadd.f32 %v255, %v256
    %v258 = vrot.slane %v257, 1
    %v259 = vadd.f32 %v257, %v258
    %v260 = vsel %vm249, %v235, 0.0
    %v261 = vsel %vm251, %v236, 0.0
    %v262 = vadd.f32 %v260, %v261
    %v263 = vrot.slane %v262, 4
    %v264 = vadd.f32 %v262, %v263
    %v265 = vrot.slane %v264, 2
    %v266 = vadd.f32 %v264, %v265
    %v267 = vrot.slane %v266, 1
    %v268 = vadd.f32 %v266, %v267
    %v269 = vsel %vm249, %v237, 0.0
    %v270 = vsel %vm251, %v238, 0.0
    %v271 = vadd.f32 %v269, %v270
    %v272 = vrot.slane %v271, 4
    %v273 = vadd.f32 %v271, %v272
    %v274 = vrot.slane %v273, 2
    %v275 = vadd.f32 %v273, %v274
    %v276 = vrot.slane %v275, 1
    %v277 = vadd.f32 %v275, %v276
    %v278 = vsel %vm249, %v239, 0.0
    %v279 = vsel %vm251, %v240, 0.0
    %v280 = vadd.f32 %v278, %v279
    %v281 = vrot.slane %v280, 4
    %v282 = vadd.f32 %v280, %v281
    %v283 = vrot.slane %v282, 2
    %v284 = vadd.f32 %v282, %v283
    %v285 = vrot.slane %v284, 1
    %v286 = vadd.f32 %v284, %v285
    %v287 = vsel %vm249, %v241, 0.0
    %v288 = vsel %vm251, %v242, 0.0
    %v289 = vadd.f32 %v287, %v288
    %v290 = vrot.slane %v289, 4
    %v291 = vadd.f32 %v289, %v290
    %v292 = vrot.slane %v291, 2
    %v293 = vadd.f32 %v291, %v292
    %v294 = vrot.slane %v293, 1
    %v295 = vadd.f32 %v293, %v294
    %v296 = vsel %vm249, %v243, 0.0
    %v297 = vsel %vm251, %v244, 0.0
    %v298 = vadd.f32 %v296, %v297
    %v299 = vrot.slane %v298, 4
    %v300 = vadd.f32 %v298, %v299
    %v301 = vrot.slane %v300, 2
    %v302 = vadd.f32 %v300, %v301
    %v303 = vrot.slane %v302, 1
    %v304 = vadd.f32 %v302, %v303
    %v305 = vsel %vm249, %v245, 0.0
    %v306 = vsel %vm251, %v246, 0.0
    %v307 = vadd.f32 %v305, %v306
    %v308 = vrot.slane %v307, 4
    %v309 = vadd.f32 %v307, %v308
    %v310 = vrot.slane %v309, 2
    %v311 = vadd.f32 %v309, %v310
    %v312 = vrot.slane %v311, 1
    %v313 = vadd.f32 %v311, %v312
    %v314 = vsel %vm249, %v247, 0.0
    %v315 = vsel %vm251, %v248, 0.0
    %v316 = vadd.f32 %v314, %v315
    %v317 = vrot.slane %v316, 4
    %v318 = vadd.f32 %v316, %v317
    %v319 = vrot.slane %v318, 2
    %v320 = vadd.f32 %v318, %v319
    %v321 = vrot.slane %v320, 1
    %v322 = vadd.f32 %v320, %v321
    %324 = vset.pattern.permute.xlu0 0
    %325 = vperm.xlu0 %324, %v145
    %v326 = vpop.permute.xlu0 %325
    %329 = vset.pattern.permute.xlu0 0
    %330 = vperm.xlu0 %329, %v146
    %v331 = vpop.permute.xlu0 %330
    %334 = vset.pattern.permute.xlu0 0
    %335 = vperm.xlu0 %334, %v147
    %v336 = vpop.permute.xlu0 %335
    %339 = vset.pattern.permute.xlu0 0
    %340 = vperm.xlu0 %339, %v148
    %v341 = vpop.permute.xlu0 %340
    %344 = vset.pattern.permute.xlu0 0
    %345 = vperm.xlu0 %344, %v149
    %v346 = vpop.permute.xlu0 %345
    %349 = vset.pattern.permute.xlu0 0
    %350 = vperm.xlu0 %349, %v150
    %v351 = vpop.permute.xlu0 %350
    %354 = vset.pattern.permute.xlu0 0
    %355 = vperm.xlu0 %354, %v151
    %v356 = vpop.permute.xlu0 %355
    %359 = vset.pattern.permute.xlu0 0
    %360 = vperm.xlu0 %359, %v152
    %v361 = vpop.permute.xlu0 %360
    %v363 = vrcp.pop %v326
    %v364 = vmul.f32 %v259, %v363
    %v365 = vrcp.pop %v331
    %v366 = vmul.f32 %v268, %v365
    %v367 = vrcp.pop %v336
    %v368 = vmul.f32 %v277, %v367
    %v369 = vrcp.pop %v341
    %v370 = vmul.f32 %v286, %v369
    %v371 = vrcp.pop %v346
    %v372 = vmul.f32 %v295, %v371
    %v373 = vrcp.pop %v351
    %v374 = vmul.f32 %v304, %v373
    %v375 = vrcp.pop %v356
    %v376 = vmul.f32 %v313, %v375
    %v377 = vrcp.pop %v361
    %v378 = vmul.f32 %v322, %v377
    %v379 = vld [vmem:[%s3] sm:$0xff]
    %v380 = vld [vmem:[%s3 + $0x8] sm:$0xff]
    %v381 = vld [vmem:[%s3 + $0x10] sm:$0xff]
    %v382 = vld [vmem:[%s3 + $0x18] sm:$0xff]
    %v383 = vld [vmem:[%s4] sm:$0x1]
    %v385 = vlaneseq
    %v386 = vshrl.u32 %v385, 7
    %v387 = vsub.s32 0, %v386
    %v388 = vrot.slane %v383, %v387
    %vm398 = vcmask 1041409
    %v399 = vsel %vm398, %v366, %v364
    %vm400 = vcmask 1042434
    %v401 = vsel %vm400, %v368, %v399
    %vm402 = vcmask 1043459
    %v403 = vsel %vm402, %v370, %v401
    %vm404 = vcmask 1044484
    %v405 = vsel %vm404, %v372, %v403
    %vm406 = vcmask 1045509
    %v407 = vsel %vm406, %v374, %v405
    %vm408 = vcmask 1046534
    %v409 = vsel %vm408, %v376, %v407
    %vm410 = vcmask 1047559
    %v411 = vsel %vm410, %v378, %v409
    %v412 = vsel %vm249, %v411, 0
    %414 = vmatprep.subr.mxu0 0.0
    %415 = vmatpush1.msra.mxu0 %v379
    %416 = vmatprep.subr.mxu0 0.0
    %417 = vmatpush1.msra.mxu0 %v380
    %418 = vmatprep.subr.mxu0 0.0
    %419 = vmatpush1.msra.mxu0 %v381
    %420 = vmatprep.subr.mxu0 0.0
    %421 = vmatpush1.msra.mxu0 %v382
    %422 = vmatprep.subr.mxu0 0.0
    %423 = vmatpush1.msra.mxu0 0.0
    %424 = vmatprep.subr.mxu0 0.0
    %425 = vmatpush1.msra.mxu0 0.0
    %426 = vmatprep.subr.mxu0 0.0
    %427 = vmatpush1.msra.mxu0 0.0
    %428 = vmatprep.subr.mxu0 0.0
    %429 = vmatpush1.msra.mxu0 0.0
    %430 = vmatprep.subr.mxu0 0.0
    %431 = vmatpush1.msra.mxu0 0.0
    %432 = vmatprep.subr.mxu0 0.0
    %433 = vmatpush1.msra.mxu0 0.0
    %434 = vmatprep.subr.mxu0 0.0
    %435 = vmatpush1.msra.mxu0 0.0
    %436 = vmatprep.subr.mxu0 0.0
    %437 = vmatpush1.msra.mxu0 0.0
    %438 = vmatprep.subr.mxu0 0.0
    %439 = vmatpush1.msra.mxu0 0.0
    %440 = vmatprep.subr.mxu0 0.0
    %441 = vmatpush1.msra.mxu0 0.0
    %442 = vmatprep.subr.mxu0 0.0
    %443 = vmatpush1.msra.mxu0 0.0
    %444 = vmatprep.subr.mxu0 0.0
    %445 = vmatpush1.msra.mxu0 0.0
    %446 = vmatprep.subr.mxu0 0.0
    %447 = vmatpush1.msra.mxu0 0.0
    %448 = vmatprep.subr.mxu0 0.0
    %449 = vmatpush1.msra.mxu0 0.0
    %450 = vmatprep.subr.mxu0 0.0
    %451 = vmatpush1.msra.mxu0 0.0
    %452 = vmatprep.subr.mxu0 0.0
    %453 = vmatpush1.msra.mxu0 0.0
    %454 = vmatprep.subr.mxu0 0.0
    %455 = vmatpush1.msra.mxu0 0.0
    %456 = vmatprep.subr.mxu0 0.0
    %457 = vmatpush1.msra.mxu0 0.0
    %458 = vmatprep.subr.mxu0 0.0
    %459 = vmatpush1.msra.mxu0 0.0
    %460 = vmatprep.subr.mxu0 0.0
    %461 = vmatpush1.msra.mxu0 0.0
    %462 = vmatprep.subr.mxu0 0.0
    %463 = vmatpush1.msra.mxu0 0.0
    %464 = vmatprep.subr.mxu0 0.0
    %465 = vmatpush1.msra.mxu0 0.0
    %466 = vmatprep.subr.mxu0 0.0
    %467 = vmatpush1.msra.mxu0 0.0
    %468 = vmatprep.subr.mxu0 0.0
    %469 = vmatpush1.msra.mxu0 0.0
    %470 = vmatprep.subr.mxu0 0.0
    %471 = vmatpush1.msra.mxu0 0.0
    %472 = vmatprep.subr.mxu0 0.0
    %473 = vmatpush1.msra.mxu0 0.0
    %474 = vmatprep.subr.mxu0 0.0
    %475 = vmatpush1.msra.mxu0 0.0
    %476 = vmatprep.subr.mxu0 0.0
    %477 = vmatpush1.msra.mxu0 0.0
    %478 = vmatprep.mubr.f32.mxu0 0.0
    %479 = vmatmul.mubr.f32.gmra.mrb[0].mxu0 %v412
    %v480 = vpop.f32.mrb[0].mxu0
    %v481 = vadd.f32 %v388, %v480
    %v482 = vpop.f32.mrb[0].mxu0
    %483 = vdwg.mxu0
    %484 = vst [vmem:[#allocation6] sm:$0xff] %v481
    %v485 = vmul.f32 %v481, %v481
    %486 = vadd.xlane.f32.xlu0 %v485
    %v487 = vpop.xlane.xlu0 %486
    %v488 = vmax.f32 %v487, 1e-24
    %v489 = vrsqrt.pop %v488
    %v490 = vstv %s37
    %v491 = vmul.f32 %v489, %v490
    %v492 = vmul.f32 %v481, %v491
    %v493 = vmul.f32 %v481, %v489
    %494 = vmatprep.subr.mxu0 0.0
    %495 = vmatpush1.xpose.msra.mxu0 %v493
    %496 = vmatprep.subr.mxu0 0.0
    %497 = vmatpush1.xpose.msra.mxu0 0.0
    %498 = vmatprep.subr.mxu0 0.0
    %499 = vmatpush1.xpose.msra.mxu0 0.0
    %500 = vmatprep.subr.mxu0 0.0
    %501 = vmatpush1.xpose.msra.mxu0 0.0
    %502 = vmatprep.subr.mxu0 0.0
    %503 = vmatpush1.xpose.msra.mxu0 0.0
    %504 = vmatprep.subr.mxu0 0.0
    %505 = vmatpush1.xpose.msra.mxu0 0.0
    %506 = vmatprep.subr.mxu0 0.0
    %507 = vmatpush1.xpose.msra.mxu0 0.0
    %508 = vmatprep.subr.mxu0 0.0
    %509 = vmatpush1.xpose.msra.mxu0 0.0
    %510 = vmatprep.subr.mxu0 0.0
    %511 = vmatpush1.xpose.msra.mxu0 0.0
    %512 = vmatprep.subr.mxu0 0.0
    %513 = vmatpush1.xpose.msra.mxu0 0.0
    %514 = vmatprep.subr.mxu0 0.0
    %515 = vmatpush1.xpose.msra.mxu0 0.0
    %516 = vmatprep.subr.mxu0 0.0
    %517 = vmatpush1.xpose.msra.mxu0 0.0
    %518 = vmatprep.subr.mxu0 0.0
    %519 = vmatpush1.xpose.msra.mxu0 0.0
    %520 = vmatprep.subr.mxu0 0.0
    %521 = vmatpush1.xpose.msra.mxu0 0.0
    %522 = vmatprep.subr.mxu0 0.0
    %523 = vmatpush1.xpose.msra.mxu0 0.0
    %524 = vmatprep.subr.mxu0 0.0
    %525 = vmatpush1.xpose.msra.mxu0 0.0
    %526 = vmatprep.subr.mxu0 0.0
    %527 = vmatpush1.xpose.msra.mxu0 0.0
    %528 = vmatprep.subr.mxu0 0.0
    %529 = vmatpush1.xpose.msra.mxu0 0.0
    %530 = vmatprep.subr.mxu0 0.0
    %531 = vmatpush1.xpose.msra.mxu0 0.0
    %532 = vmatprep.subr.mxu0 0.0
    %533 = vmatpush1.xpose.msra.mxu0 0.0
    %534 = vmatprep.subr.mxu0 0.0
    %535 = vmatpush1.xpose.msra.mxu0 0.0
    %536 = vmatprep.subr.mxu0 0.0
    %537 = vmatpush1.xpose.msra.mxu0 0.0
    %538 = vmatprep.subr.mxu0 0.0
    %539 = vmatpush1.xpose.msra.mxu0 0.0
    %540 = vmatprep.subr.mxu0 0.0
    %541 = vmatpush1.xpose.msra.mxu0 0.0
    %542 = vmatprep.subr.mxu0 0.0
    %543 = vmatpush1.xpose.msra.mxu0 0.0
    %544 = vmatprep.subr.mxu0 0.0
    %545 = vmatpush1.xpose.msra.mxu0 0.0
    %546 = vmatprep.subr.mxu0 0.0
    %547 = vmatpush1.xpose.msra.mxu0 0.0
    %548 = vmatprep.subr.mxu0 0.0
    %549 = vmatpush1.xpose.msra.mxu0 0.0
    %550 = vmatprep.subr.mxu0 0.0
    %551 = vmatpush1.xpose.msra.mxu0 0.0
    %552 = vmatprep.subr.mxu0 0.0
    %553 = vmatpush1.xpose.msra.mxu0 0.0
    %554 = vmatprep.subr.mxu0 0.0
    %555 = vmatpush1.xpose.msra.mxu0 0.0
    %556 = vmatprep.subr.mxu0 0.0
    %557 = vmatpush1.xpose.msra.mxu0 0.0
    %558 = vmatprep.mubr.f32.mxu0 0.0
    %559 = vmatmul.mubr.f32.gmra.mrb[0].mxu0 %v492
    %v560 = vpop.f32.mrb[0].mxu0
    %v561 = vadd.f32 0.0, %v560
    %v562 = vpop.f32.mrb[0].mxu0
    %563 = vdwg.mxu0
    %vm564 = vcmask 64512
    %v565 = vsel %vm564, %v561, -inf
    %566 = vmax.xlane.f32.xlu0 %v565
    %v567 = vpop.xlane.xlu0 %566
    %v568 = vsub.f32 %v561, %v567
    %v569 = vmul.f32 %v568, 1.442695
    %v570 = vpow.pop %v569
    %v571 = vsel %vm564, %v570, 0.0
    %572 = vadd.xlane.f32.xlu0 %v571
    %v573 = vpop.xlane.xlu0 %572
    %v574 = vlog2.pop %v573
    %v575 = vmul.f32 %v574, 0.6931472
    %v576 = vadd.f32 %v575, %v567
    %v577 = vmul.f32 %v492, %v493
    %578 = vadd.xlane.f32.xlu0 %v577
    %v579 = vpop.xlane.xlu0 %578
    %v580 = vsub.f32 %v579, %v576
    %v581 = vsel %vm71, %v580, 0.0
    %582 = vadd.xlane.f32.xlu0 %v581
    %v583 = vpop.xlane.xlu0 %582
    %v584 = vrot.slane %v583, 4
    %v585 = vadd.f32 %v583, %v584
    %v586 = vrot.slane %v585, 2
    %v587 = vadd.f32 %v585, %v586
    %v588 = vrot.slane %v587, 1
    %v589 = vadd.f32 %v587, %v588
    %s590 = vtos %v589
    %v591 = vrcp.pop 8.0
    %s592 = vtos %v591
    %s593 = smul.f32 %s590, %s592
    %s594 = ssub.f32 0.0, %s593
    %s595 = smul.f32 %s594, %s38
    %s596 = scalar_lea.smem [#allocation7], 0
    %597 = sst [smem:[%s596]] %s595
    // Predicated region
    $region26: #{tpu_custom_call.1} parent=1 // pred_check
      _
    $region27: #{tpu_custom_call.1} parent=1 // pred_check_branch
      %599 = sbr.rel (0) target = $region29
    $region28: #{tpu_custom_call.1} parent=1 // pred_region
      %s601 = ssub.s32 128, 128
      %602 = vsyncadd [#allocation3], %s601
      %s604 = sshll.u32 [#allocation6], 4
      %s605 = int_to_ptr.vmem [resolvable:$true] %s604
      %607 = dma.vmem_to_hbm [thread:$0]  %s605, 128, %s5, [#allocation3]
    $region29: #{tpu_custom_call.1} parent=1 // pred_fallthru
      _
    // Predicated region
    $region30: #{tpu_custom_call.1} parent=1 // pred_check
      _
    $region31: #{tpu_custom_call.1} parent=1 // pred_check_branch
      %609 = sbr.rel (0) target = $region33
    $region32: #{tpu_custom_call.1} parent=1 // pred_region
      %s611 = ssub.s32 16, 16
      %612 = vsyncadd [#allocation4], %s611
      %615 = dma.smem_to_hbm [#allocation7], 16, %s6, [#allocation4]
    $region33: #{tpu_custom_call.1} parent=1 // pred_fallthru
      _
    // Predicated region
    $region34: #{tpu_custom_call.1} parent=1 // pred_check
      _
    $region35: #{tpu_custom_call.1} parent=1 // pred_check_branch
      %617 = sbr.rel (0) target = $region37
    $region36: #{tpu_custom_call.1} parent=1 // pred_region
      %618 = dma.done [#allocation3], 128
    $region37: #{tpu_custom_call.1} parent=1 // pred_fallthru
      _
    // Predicated region
    $region38: #{tpu_custom_call.1} parent=1 // pred_check
      _
    $region39: #{tpu_custom_call.1} parent=1 // pred_check_branch
      %620 = sbr.rel (0) target = $region41
    $region40: #{tpu_custom_call.1} parent=1 // pred_region
      %621 = dma.done [#allocation4], 16
    $region41: #{tpu_custom_call.1} parent=1 // pred_fallthru
      _
    %622 = sfence
    %623 = vsyncpa [#allocation3], 1
    %624 = vsyncpa [#allocation4], 1
    %625 = vsyncpa [#allocation5], 1

</llo_original>
